<compile_context>
chip_gen: v7x
topology: tpu7x:2x2x1
jax: 0.10.0
libtpu: 0.0.40
codegen_flags: <defaults>
</compile_context>

<pallas_src>
import functools

import jax
import jax.numpy as jnp
from jax.experimental import pallas as pl
from jax.experimental.pallas import tpu as pltpu

LANE = 128
TILE_CAP = 16384  # lanes per block; keeps the (H, TILE) f32 intermediate ~2 MiB


def _round_up(x: int, m: int) -> int:
    return (x + m - 1) // m * m


def _cdiv(a: int, b: int) -> int:
    return -(-a // b)


def _synthetic_reward_kernel(vals_ref, pres_ref, mean_ref, w1s_ref, b1_ref,
                             w2_ref, b2_ref, out_ref):
    # presence arrives narrow (bf16 0/1); widen on the VPU.
    pres = pres_ref[...].astype(jnp.float32)

    # Preprocessor (state + action fused; 1/std already folded into W1'):
    #   x = (v - mean) * presence        shape (D, TILE), timesteps lane-dense
    x = (vals_ref[...] - mean_ref[...]) * pres

    # Layer 1 on the MXU: (H, D) @ (D, TILE) -> (H, TILE), true f32 accuracy.
    h = jnp.dot(w1s_ref[...], x,
                preferred_element_type=jnp.float32,
                precision=jax.lax.Precision.HIGHEST) + b1_ref[...]
    h = jnp.maximum(h, 0.0)

    # Layer 2 (H -> 1) also on the MXU: (1, H) @ (H, TILE) -> (1, TILE),
    # keeping the result lane-dense.  b2 is a scalar read from SMEM.
    y = jnp.dot(w2_ref[...], h,
                preferred_element_type=jnp.float32,
                precision=jax.lax.Precision.HIGHEST) + b2_ref[0, 0]

    # sigmoid = 1 / (1 + exp(-y)); exp and reciprocal both use the EUP slot.
    # (approx=True would be free but breaks the 1e-5 reference comparison.)
    out_ref[...] = pl.reciprocal(1.0 + jnp.exp(-y), approx=False)


def _predict_lanes(vals_t, pres_t, mean, inv_std, w1, b1, w2, b2):
    """Core launcher: vals_t/pres_t are (D, N) with all timesteps on lanes."""
    D, N = vals_t.shape
    H = w1.shape[1]

    # Fold per-feature 1/std into layer-1 weights (a diagonal per-feature scale
    # commutes with the presence mask) and transpose so the kernel computes
    # h = W1' @ x.  The mean is NOT folded into b1 (wrong under masking).
    w1s = (w1.astype(jnp.float32) * inv_std[:, None]).T            # (H, D)
    mean_col = mean.reshape(D, 1).astype(jnp.float32)              # (D, 1)
    b1_col = b1.reshape(H, 1).astype(jnp.float32)                  # (H, 1)
    w2_row = w2.reshape(1, H).astype(jnp.float32)                  # (1, H)
    b2_s = b2.reshape(1, 1).astype(jnp.float32)                    # (1, 1)

    # Lane tile: large enough to bury the ~0.35 us/step grid overhead, small
    # enough for v5e's scoped VMEM, and split into >=2 blocks when there is
    # enough work so v7x's two TensorCores both run ("parallel" axis).
    # Ragged tails are handled by Pallas boundary blocks — no jnp.pad pass.
    lanes = _round_up(N, LANE)
    tile_s = max(LANE, min(TILE_CAP, _round_up(_cdiv(lanes, 2), LANE)))
    grid = (_cdiv(N, tile_s),)

    seq_spec = pl.BlockSpec((D, tile_s), lambda i: (0, i))

    def const_spec(shape):
        # Constant block index -> operand stays VMEM-resident across the grid.
        return pl.BlockSpec(shape, lambda i: (0, 0))

    out = pl.pallas_call(
        _synthetic_reward_kernel,
        out_shape=jax.ShapeDtypeStruct((1, N), jnp.float32),
        grid=grid,
        in_specs=[
            seq_spec,                                            # values   (D, N)  f32
            seq_spec,                                            # presence (D, N)  bf16
            const_spec((D, 1)),                                  # mean
            const_spec((H, D)),                                  # W1' (1/std folded)
            const_spec((H, 1)),                                  # b1
            const_spec((1, H)),                                  # w2 row
            pl.BlockSpec(memory_space=pltpu.MemorySpace.SMEM),   # b2 scalar
        ],
        out_specs=pl.BlockSpec((1, tile_s), lambda i: (0, i)),   # lane-dense output
        compiler_params=pltpu.CompilerParams(
            dimension_semantics=("parallel",),
            vmem_limit_bytes=32 * 1024 * 1024),
    )(vals_t, pres_t, mean_col, w1s, b1_col, w2_row, b2_s)
    return out[0]


def _fused_preproc_params(state_params, action_params):
    s_mean, s_std = state_params
    a_mean, a_std = action_params
    mean = jnp.concatenate([jnp.ravel(s_mean), jnp.ravel(a_mean)]).astype(jnp.float32)
    inv_std = 1.0 / jnp.concatenate([jnp.ravel(s_std), jnp.ravel(a_std)]).astype(jnp.float32)
    return mean, inv_std


@functools.partial(jax.jit, static_argnames=("state_feat_num", "action_feat_num"))
def synthetic_reward_predictor_batched(values, presence, state_params, action_params,
                                       w1, b1, w2, b2, *,
                                       state_feat_num, action_feat_num):
    """Batched forward: values/presence are (B, S, D); returns (B, S) rewards."""
    B, S, D = values.shape
    assert D == state_feat_num + action_feat_num
    assert presence.shape == (B, S, D)
    mean, inv_std = _fused_preproc_params(state_params, action_params)

    # TODO(synk): produce (D, B*S) upstream to eliminate this transpose pass
    # (the kernel itself is HBM-bound, so this pre-pass ~doubles bytes moved).
    vals_t = jnp.transpose(values.astype(jnp.float32), (2, 0, 1)).reshape(D, B * S)
    pres_t = jnp.transpose(presence, (2, 0, 1)).reshape(D, B * S)

    rewards = _predict_lanes(vals_t, pres_t, mean, inv_std, w1, b1, w2, b2)
    return rewards.reshape(B, S)


def synthetic_reward_predictor(values, presence, state_params, action_params,
                               w1, b1, w2, b2,
                               state_feat_num, action_feat_num, seq_len):
    """Single-sequence forward matching SyntheticRewardPredictorWrapper.forward."""
    assert values.shape[0] == seq_len
    out = synthetic_reward_predictor_batched(
        values[None], presence[None], state_params, action_params,
        w1, b1, w2, b2,
        state_feat_num=state_feat_num, action_feat_num=action_feat_num)
    return out.reshape(-1)   # reward = net(...).flatten()


if __name__ == "__main__":
    seq_len = 8
    state_feat_num = 4
    action_feat_num = 4
    hidden = 32
    D = state_feat_num + action_feat_num

    key = jax.random.PRNGKey(0)
    (k_val, k_pres, k_smean, k_sstd, k_amean, k_astd,
     k_w1, k_b1, k_w2, k_b2, k_bval, k_bpres) = jax.random.split(key, 12)

    # deterministic synthetic preprocessor params (per-feature mean / std)
    state_mean = jax.random.normal(k_smean, (state_feat_num,), jnp.float32) * 0.1
    state_std = jax.random.uniform(k_sstd, (state_feat_num,), minval=0.5, maxval=1.5)
    action_mean = jax.random.normal(k_amean, (action_feat_num,), jnp.float32) * 0.1
    action_std = jax.random.uniform(k_astd, (action_feat_num,), minval=0.5, maxval=1.5)

    # deterministic net params (2-layer MLP, sigmoid output per timestep)
    w1 = jax.random.normal(k_w1, (D, hidden), jnp.float32) * (1.0 / jnp.sqrt(D))
    b1 = jax.random.normal(k_b1, (1, hidden), jnp.float32) * 0.01
    w2 = jax.random.normal(k_w2, (hidden, 1), jnp.float32) * (1.0 / jnp.sqrt(hidden))
    b2 = jax.random.normal(k_b2, (1, 1), jnp.float32) * 0.01

    mean_all = jnp.concatenate([state_mean, action_mean]).reshape(1, D)
    std_all = jnp.concatenate([state_std, action_std]).reshape(1, D)

    def reference(vals_2d, pres_2d):
        # pure-JAX reference (original-module math: divide by std, no folding)
        x = (vals_2d - mean_all) / std_all * pres_2d
        h = jnp.maximum(jnp.dot(x, w1, precision=jax.lax.Precision.HIGHEST) + b1, 0.0)
        y = jnp.dot(h, w2, precision=jax.lax.Precision.HIGHEST) + b2
        return (1.0 / (1.0 + jnp.exp(-y))).reshape(-1)

    # --- 1) single sequence, matching the module's forward() signature -------
    values = jax.random.normal(k_val, (seq_len, D), jnp.float32)
    presence = (jax.random.uniform(k_pres, (seq_len, D)) > 0.2).astype(jnp.bfloat16)

    reward = synthetic_reward_predictor(
        values, presence,
        (state_mean, state_std), (action_mean, action_std),
        w1, b1, w2, b2,
        state_feat_num, action_feat_num, seq_len)
    jax.block_until_ready(reward)

    ref = reference(values, presence.astype(jnp.float32))
    assert reward.shape == (seq_len,)
    assert jnp.allclose(reward, ref, atol=1e-5, rtol=1e-5), \
        float(jnp.max(jnp.abs(reward - ref)))

    # --- 2) batched: many sequences folded onto the lane axis in one call ----
    B = 63   # odd count -> exercises the partial boundary block (no jnp.pad)
    bvals = jax.random.normal(k_bval, (B, seq_len, D), jnp.float32)
    bpres = (jax.random.uniform(k_bpres, (B, seq_len, D)) > 0.2).astype(jnp.bfloat16)

    brewards = synthetic_reward_predictor_batched(
        bvals, bpres,
        (state_mean, state_std), (action_mean, action_std),
        w1, b1, w2, b2,
        state_feat_num=state_feat_num, action_feat_num=action_feat_num)
    jax.block_until_ready(brewards)

    bref = reference(bvals.reshape(B * seq_len, D),
                     bpres.astype(jnp.float32).reshape(B * seq_len, D))
    assert brewards.shape == (B, seq_len)
    assert jnp.allclose(brewards.reshape(-1), bref, atol=1e-5, rtol=1e-5), \
        float(jnp.max(jnp.abs(brewards.reshape(-1) - bref)))

    print("KERNEL_OK")
</pallas_src>

<mosaic_0001>
module attributes {stable_mosaic.version = 11 : i64} {
  func.func @_synthetic_reward_kernel(%arg0: i32, %arg1: memref<8x128xf32, #tpu.memory_space<vmem>>, %arg2: memref<8x128xbf16, #tpu.memory_space<vmem>>, %arg3: memref<8x1xf32, #tpu.memory_space<vmem>>, %arg4: memref<32x8xf32, #tpu.memory_space<vmem>>, %arg5: memref<32x1xf32, #tpu.memory_space<vmem>>, %arg6: memref<1x32xf32, #tpu.memory_space<vmem>>, %arg7: memref<1x1xf32, #tpu.memory_space<smem>>, %arg8: memref<1x128xf32, #tpu.memory_space<vmem>>) attributes {dimension_semantics = [#tpu.dimension_semantics<parallel>], iteration_bounds = array<i64: 1>, scalar_prefetch = 0 : i64, scratch_operands = 0 : i64, tpu.core_type = #tpu.core_type<tc>, window_params = [{transform_indices = @transform_0, window_bounds = array<i64: 8, 128>}, {transform_indices = @transform_1, window_bounds = array<i64: 8, 128>}, {pipeline_mode = #tpu.pipeline_mode<synchronous>, transform_indices = @transform_2, window_bounds = array<i64: 8, 1>}, {pipeline_mode = #tpu.pipeline_mode<synchronous>, transform_indices = @transform_3, window_bounds = array<i64: 32, 8>}, {pipeline_mode = #tpu.pipeline_mode<synchronous>, transform_indices = @transform_4, window_bounds = array<i64: 32, 1>}, {pipeline_mode = #tpu.pipeline_mode<synchronous>, transform_indices = @transform_5, window_bounds = array<i64: 1, 32>}, {transform_indices = @transform_6, window_bounds = array<i64: 1, 1>}, {transform_indices = @transform_7, window_bounds = array<i64: 1, 128>}]} {
    %c0 = arith.constant 0 : index
    %c0_0 = arith.constant 0 : index
    %0 = vector.load %arg2[%c0, %c0_0] : memref<8x128xbf16, #tpu.memory_space<vmem>>, vector<8x128xbf16>
    %1 = arith.extf %0 : vector<8x128xbf16> to vector<8x128xf32>
    %c0_1 = arith.constant 0 : index
    %c0_2 = arith.constant 0 : index
    %2 = vector.load %arg1[%c0_1, %c0_2] : memref<8x128xf32, #tpu.memory_space<vmem>>, vector<8x128xf32>
    %c0_3 = arith.constant 0 : index
    %c0_4 = arith.constant 0 : index
    %3 = vector.load %arg3[%c0_3, %c0_4] : memref<8x1xf32, #tpu.memory_space<vmem>>, vector<8x1xf32>
    %4 = vector.broadcast %3 : vector<8x1xf32> to vector<8x128xf32>
    %5 = arith.subf %2, %4 : vector<8x128xf32>
    %6 = arith.mulf %5, %1 : vector<8x128xf32>
    %c0_5 = arith.constant 0 : index
    %c0_6 = arith.constant 0 : index
    %7 = vector.load %arg4[%c0_5, %c0_6] : memref<32x8xf32, #tpu.memory_space<vmem>>, vector<32x8xf32>
    %cst = arith.constant dense<0.000000e+00> : vector<32x128xf32>
    %8 = tpu.matmul %7, %6, %cst {dimension_numbers = #tpu.dot_dimension_numbers<[1], [0], [0], [1], [0, 0, 1, 1], [], []>, precision = #tpu.contract_precision<fp32>} : vector<32x8xf32>, vector<8x128xf32>, vector<32x128xf32> -> vector<32x128xf32>
    %c0_7 = arith.constant 0 : index
    %c0_8 = arith.constant 0 : index
    %9 = vector.load %arg5[%c0_7, %c0_8] : memref<32x1xf32, #tpu.memory_space<vmem>>, vector<32x1xf32>
    %10 = vector.broadcast %9 : vector<32x1xf32> to vector<32x128xf32>
    %11 = arith.addf %8, %10 : vector<32x128xf32>
    %cst_9 = arith.constant 0.000000e+00 : f32
    %12 = vector.broadcast %cst_9 : f32 to vector<32x128xf32>
    %13 = arith.maximumf %11, %12 : vector<32x128xf32>
    %c0_10 = arith.constant 0 : index
    %c0_11 = arith.constant 0 : index
    %14 = vector.load %arg6[%c0_10, %c0_11] : memref<1x32xf32, #tpu.memory_space<vmem>>, vector<1x32xf32>
    %cst_12 = arith.constant dense<0.000000e+00> : vector<1x128xf32>
    %15 = tpu.matmul %14, %13, %cst_12 {dimension_numbers = #tpu.dot_dimension_numbers<[1], [0], [0], [1], [0, 0, 1, 1], [], []>, precision = #tpu.contract_precision<fp32>} : vector<1x32xf32>, vector<32x128xf32>, vector<1x128xf32> -> vector<1x128xf32>
    %c0_13 = arith.constant 0 : index
    %c0_14 = arith.constant 0 : index
    %16 = memref.load %arg7[%c0_13, %c0_14] : memref<1x1xf32, #tpu.memory_space<smem>>
    %17 = vector.broadcast %16 : f32 to vector<1x128xf32>
    %18 = arith.addf %15, %17 : vector<1x128xf32>
    %cst_15 = arith.constant 0.000000e+00 : f32
    %19 = vector.broadcast %cst_15 : f32 to vector<1x128xf32>
    %20 = arith.subf %19, %18 : vector<1x128xf32>
    %21 = math.exp %20 : vector<1x128xf32>
    %cst_16 = arith.constant 1.000000e+00 : f32
    %22 = vector.broadcast %cst_16 : f32 to vector<1x128xf32>
    %23 = arith.addf %22, %21 : vector<1x128xf32>
    %24 = tpu.reciprocal %23 : vector<1x128xf32> -> vector<1x128xf32>
    %c0_17 = arith.constant 0 : index
    %c0_18 = arith.constant 0 : index
    %25 = vector.load %arg8[%c0_17, %c0_18] : memref<1x128xf32, #tpu.memory_space<vmem>>, vector<1x128xf32>
    tpu.vector_store %arg8[%c0_17, %c0_18], %24 {strides = array<i32>} : memref<1x128xf32, #tpu.memory_space<vmem>>, vector<1x128xf32>,
    return
  }
  func.func @transform_0(%arg0: i32) -> (i32, i32) {
    %c0_i32 = arith.constant 0 : i32
    %c0_i32_0 = arith.constant 0 : i32
    return %c0_i32, %arg0 : i32, i32
  }
  func.func @transform_1(%arg0: i32) -> (i32, i32) {
    %c0_i32 = arith.constant 0 : i32
    %c0_i32_0 = arith.constant 0 : i32
    return %c0_i32, %arg0 : i32, i32
  }
  func.func @transform_2(%arg0: i32) -> (i32, i32) {
    %c0_i32 = arith.constant 0 : i32
    %c0_i32_0 = arith.constant 0 : i32
    %c0_i32_1 = arith.constant 0 : i32
    return %c0_i32, %c0_i32_0 : i32, i32
  }
  func.func @transform_3(%arg0: i32) -> (i32, i32) {
    %c0_i32 = arith.constant 0 : i32
    %c0_i32_0 = arith.constant 0 : i32
    %c0_i32_1 = arith.constant 0 : i32
    return %c0_i32, %c0_i32_0 : i32, i32
  }
  func.func @transform_4(%arg0: i32) -> (i32, i32) {
    %c0_i32 = arith.constant 0 : i32
    %c0_i32_0 = arith.constant 0 : i32
    %c0_i32_1 = arith.constant 0 : i32
    return %c0_i32, %c0_i32_0 : i32, i32
  }
  func.func @transform_5(%arg0: i32) -> (i32, i32) {
    %c0_i32 = arith.constant 0 : i32
    %c0_i32_0 = arith.constant 0 : i32
    %c0_i32_1 = arith.constant 0 : i32
    return %c0_i32, %c0_i32_0 : i32, i32
  }
  func.func @transform_6(%arg0: i32) -> (i32, i32) {
    %c0_i32 = arith.constant 0 : i32
    %c0_i32_0 = arith.constant 0 : i32
    %c0_i32_1 = arith.constant 0 : i32
    return %c0_i32, %c0_i32_0 : i32, i32
  }
  func.func @transform_7(%arg0: i32) -> (i32, i32) {
    %c0_i32 = arith.constant 0 : i32
    %c0_i32_0 = arith.constant 0 : i32
    return %c0_i32, %arg0 : i32, i32
  }
}

</mosaic_0001>

<llo_original>
// kernel: synthetic_reward_predictor_batched.1
$region0: #{synthetic_reward_predictor_batched.1}
  #allocation0 [shape = 'u32[]', space=smem, size = 0x4, offset = 0x4, fixed_abs, tag = 'smem constant byte address 0x4 - core index']
  #allocation1 [shape = 'u32[144,128]{1,0:T(1,128)}', space=vmem, size = 0x12000, scoped, tag = 'internal scratch']
  #allocation2 [shape = 'f32[1,1]{1,0:T(1,128)S(6)}', space=smem, size = 0x200, scoped, tag = 'scoped memory for synthetic_reward_predictor_batched.1']
  %s0 = inlined_call_operand.vmem [shape: f32[8,8], index: 0, kind: input, shape index: {}]
  %s1 = inlined_call_operand.vmem [shape: bf16[8,8], index: 1, kind: input, shape index: {}]
  %s2 = inlined_call_operand.vmem [shape: f32[8,1], index: 2, kind: input, shape index: {}]
  %s3 = inlined_call_operand.vmem [shape: f32[32,8], index: 3, kind: input, shape index: {}]
  %s4 = inlined_call_operand.vmem [shape: f32[32,1], index: 4, kind: input, shape index: {}]
  %s5 = inlined_call_operand.vmem [shape: f32[1,32], index: 5, kind: input, shape index: {}]
  %s6 = inlined_call_operand.<no memory space> [shape: f32[1,1], index: 6, kind: input, shape index: {}]
  %s7 = inlined_call_operand.hbm [shape: f32[1,8], index: 7, kind: output, shape index: {}]
  %s8 = sld [smem:[#allocation0]]
  $region38: #{synthetic_reward_predictor_batched.1} parent=0
    _
  %s10 = ssub.s32 1, %s8
  %s11 = scalar_select 0, %s10, %s8
  %12 = sst [smem:[#allocation2]] %s6
  $region1: #{synthetic_reward_predictor_batched.1} parent=0
    #allocation3 [shape = 'u8[512]{0}', space=vmem, size = 0x400, scoped, tag = 'output window, operand 0, single buffered']
    #allocation4 [shape = 's32[1]{0}', space=sflag, size = 0x4, scoped, tag = 'scoped memory for synthetic_reward_predictor_batched.1']
    %13 = vsyncpa [#allocation4], 0
    // Predicated region
    $region2: #{synthetic_reward_predictor_batched.1} parent=1 // pred_check
      _
    $region3: #{synthetic_reward_predictor_batched.1} parent=1 // pred_check_branch
      %15 = sbr.rel (0) target = $region5
    $region4: #{synthetic_reward_predictor_batched.1} parent=1 // pred_region
      _
    $region5: #{synthetic_reward_predictor_batched.1} parent=1 // pred_fallthru
      _
    // Predicated region
    $region6: #{synthetic_reward_predictor_batched.1} parent=1 // pred_check
      _
    $region7: #{synthetic_reward_predictor_batched.1} parent=1 // pred_check_branch
      %17 = sbr.rel (0) target = $region9
    $region8: #{synthetic_reward_predictor_batched.1} parent=1 // pred_region
      _
    $region9: #{synthetic_reward_predictor_batched.1} parent=1 // pred_fallthru
      _
    // Predicated region
    $region10: #{synthetic_reward_predictor_batched.1} parent=1 // pred_check
      _
    $region11: #{synthetic_reward_predictor_batched.1} parent=1 // pred_check_branch
      %19 = sbr.rel (0) target = $region13
    $region12: #{synthetic_reward_predictor_batched.1} parent=1 // pred_region
      _
    $region13: #{synthetic_reward_predictor_batched.1} parent=1 // pred_fallthru
      _
    // Predicated region
    $region14: #{synthetic_reward_predictor_batched.1} parent=1 // pred_check
      _
    $region15: #{synthetic_reward_predictor_batched.1} parent=1 // pred_check_branch
      %21 = sbr.rel (0) target = $region17
    $region16: #{synthetic_reward_predictor_batched.1} parent=1 // pred_region
      _
    $region17: #{synthetic_reward_predictor_batched.1} parent=1 // pred_fallthru
      _
    // Predicated region
    $region18: #{synthetic_reward_predictor_batched.1} parent=1 // pred_check
      _
    $region19: #{synthetic_reward_predictor_batched.1} parent=1 // pred_check_branch
      %23 = sbr.rel (0) target = $region21
    $region20: #{synthetic_reward_predictor_batched.1} parent=1 // pred_region
      _
    $region21: #{synthetic_reward_predictor_batched.1} parent=1 // pred_fallthru
      _
    // Predicated region
    $region22: #{synthetic_reward_predictor_batched.1} parent=1 // pred_check
      _
    $region23: #{synthetic_reward_predictor_batched.1} parent=1 // pred_check_branch
      %25 = sbr.rel (0) target = $region25
    $region24: #{synthetic_reward_predictor_batched.1} parent=1 // pred_region
      _
    $region25: #{synthetic_reward_predictor_batched.1} parent=1 // pred_fallthru
      _
    // Predicated region
    $region26: #{synthetic_reward_predictor_batched.1} parent=1 // pred_check
      _
    $region27: #{synthetic_reward_predictor_batched.1} parent=1 // pred_check_branch
      %27 = sbr.rel (0) target = $region29
    $region28: #{synthetic_reward_predictor_batched.1} parent=1 // pred_region
      _
    $region29: #{synthetic_reward_predictor_batched.1} parent=1 // pred_fallthru
      _
    %v28 = vld [vmem:[%s1] sm:$0xf]
    %v29 = vunpack.c.l.bf16 %v28
    %v30 = vld [vmem:[%s0] sm:$0xff]
    %v31 = vld [vmem:[%s2] sm:$0xff]
    %33 = vset.pattern.permute.xlu0 0
    %34 = vperm.xlu0 %33, %v31
    %v35 = vpop.permute.xlu0 %34
    %v37 = vsub.f32 %v30, %v35
    %v38 = vmul.f32 %v37, %v29
    %v39 = vld [vmem:[%s3] sm:$0xff]
    %v40 = vld [vmem:[%s3 + $0x8] sm:$0xff]
    %v41 = vld [vmem:[%s3 + $0x10] sm:$0xff]
    %v42 = vld [vmem:[%s3 + $0x18] sm:$0xff]
    %v43 = vld [vmem:[%s4] sm:$0xff]
    %v44 = vld [vmem:[%s4 + $0x8] sm:$0xff]
    %v45 = vld [vmem:[%s4 + $0x10] sm:$0xff]
    %v46 = vld [vmem:[%s4 + $0x18] sm:$0xff]
    %48 = vset.pattern.permute.xlu0 0
    %49 = vperm.xlu0 %48, %v43
    %v50 = vpop.permute.xlu0 %49
    %53 = vset.pattern.permute.xlu0 0
    %54 = vperm.xlu0 %53, %v44
    %v55 = vpop.permute.xlu0 %54
    %58 = vset.pattern.permute.xlu0 0
    %59 = vperm.xlu0 %58, %v45
    %v60 = vpop.permute.xlu0 %59
    %63 = vset.pattern.permute.xlu0 0
    %64 = vperm.xlu0 %63, %v46
    %v65 = vpop.permute.xlu0 %64
    %vm67 = vcmask 64512
    %v69 = vsel %vm67, %v39, 0
    %v72 = vsel %vm67, %v40, 0
    %v75 = vsel %vm67, %v41, 0
    %v78 = vsel %vm67, %v42, 0
    %80 = vmatprep.subr.mxu0 0.0
    %v81 = vand.u32 %v38, 4294901760
    %82 = vmatpush1.msra.mxu0 %v81
    %83 = vmatprep.subr.mxu0 0.0
    %84 = vmatpush1.msra.mxu0 0.0
    %85 = vmatprep.subr.mxu0 0.0
    %86 = vmatpush1.msra.mxu0 0.0
    %87 = vmatprep.subr.mxu0 0.0
    %88 = vmatpush1.msra.mxu0 0.0
    %89 = vmatprep.subr.mxu0 0.0
    %90 = vmatpush1.msra.mxu0 0.0
    %91 = vmatprep.subr.mxu0 0.0
    %92 = vmatpush1.msra.mxu0 0.0
    %93 = vmatprep.subr.mxu0 0.0
    %94 = vmatpush1.msra.mxu0 0.0
    %95 = vmatprep.subr.mxu0 0.0
    %96 = vmatpush1.msra.mxu0 0.0
    %97 = vmatprep.subr.mxu0 0.0
    %98 = vmatpush1.msra.mxu0 0.0
    %99 = vmatprep.subr.mxu0 0.0
    %100 = vmatpush1.msra.mxu0 0.0
    %101 = vmatprep.subr.mxu0 0.0
    %102 = vmatpush1.msra.mxu0 0.0
    %103 = vmatprep.subr.mxu0 0.0
    %104 = vmatpush1.msra.mxu0 0.0
    %105 = vmatprep.subr.mxu0 0.0
    %106 = vmatpush1.msra.mxu0 0.0
    %107 = vmatprep.subr.mxu0 0.0
    %108 = vmatpush1.msra.mxu0 0.0
    %109 = vmatprep.subr.mxu0 0.0
    %110 = vmatpush1.msra.mxu0 0.0
    %111 = vmatprep.subr.mxu0 0.0
    %112 = vmatpush1.msra.mxu0 0.0
    %113 = vmatprep.subr.mxu0 0.0
    %114 = vmatpush1.msra.mxu0 0.0
    %115 = vmatprep.subr.mxu0 0.0
    %116 = vmatpush1.msra.mxu0 0.0
    %117 = vmatprep.subr.mxu0 0.0
    %118 = vmatpush1.msra.mxu0 0.0
    %119 = vmatprep.subr.mxu0 0.0
    %120 = vmatpush1.msra.mxu0 0.0
    %121 = vmatprep.subr.mxu0 0.0
    %122 = vmatpush1.msra.mxu0 0.0
    %123 = vmatprep.subr.mxu0 0.0
    %124 = vmatpush1.msra.mxu0 0.0
    %125 = vmatprep.subr.mxu0 0.0
    %126 = vmatpush1.msra.mxu0 0.0
    %127 = vmatprep.subr.mxu0 0.0
    %128 = vmatpush1.msra.mxu0 0.0
    %129 = vmatprep.subr.mxu0 0.0
    %130 = vmatpush1.msra.mxu0 0.0
    %131 = vmatprep.subr.mxu0 0.0
    %132 = vmatpush1.msra.mxu0 0.0
    %133 = vmatprep.subr.mxu0 0.0
    %134 = vmatpush1.msra.mxu0 0.0
    %135 = vmatprep.subr.mxu0 0.0
    %136 = vmatpush1.msra.mxu0 0.0
    %137 = vmatprep.subr.mxu0 0.0
    %138 = vmatpush1.msra.mxu0 0.0
    %139 = vmatprep.subr.mxu0 0.0
    %140 = vmatpush1.msra.mxu0 0.0
    %141 = vmatprep.subr.mxu0 0.0
    %142 = vmatpush1.msra.mxu0 0.0
    %143 = vmatprep.subr.mxu0 0.0
    %144 = vmatpush1.msra.mxu0 0.0
    %145 = vmatprep.mubr.f32.mxu0 0.0
    %v146 = vand.u32 %v69, 4294901760
    %v147 = vsub.f32 %v69, %v146
    %v148 = vand.u32 %v147, 4294901760
    %v149 = vsub.f32 %v147, %v148
    %v150 = vand.u32 %v149, 4294901760
    %151 = vmatmul.mubr.f32.gmra.mrb[0].mxu0 %v150
    %v152 = vpop.f32.mrb[0].mxu0
    %v153 = vadd.f32 %v50, %v152
    %v154 = vpop.f32.mrb[0].mxu0
    %155 = vmatprep.mubr.f32.mxu0 0.0
    %v156 = vand.u32 %v72, 4294901760
    %v157 = vsub.f32 %v72, %v156
    %v158 = vand.u32 %v157, 4294901760
    %v159 = vsub.f32 %v157, %v158
    %v160 = vand.u32 %v159, 4294901760
    %161 = vmatmul.mubr.f32.gmra.mrb[0].mxu0 %v160
    %v162 = vpop.f32.mrb[0].mxu0
    %v163 = vadd.f32 %v55, %v162
    %v164 = vpop.f32.mrb[0].mxu0
    %165 = vmatprep.mubr.f32.mxu0 0.0
    %v166 = vand.u32 %v75, 4294901760
    %v167 = vsub.f32 %v75, %v166
    %v168 = vand.u32 %v167, 4294901760
    %v169 = vsub.f32 %v167, %v168
    %v170 = vand.u32 %v169, 4294901760
    %171 = vmatmul.mubr.f32.gmra.mrb[0].mxu0 %v170
    %v172 = vpop.f32.mrb[0].mxu0
    %v173 = vadd.f32 %v60, %v172
    %v174 = vpop.f32.mrb[0].mxu0
    %175 = vmatprep.mubr.f32.mxu0 0.0
    %v176 = vand.u32 %v78, 4294901760
    %v177 = vsub.f32 %v78, %v176
    %v178 = vand.u32 %v177, 4294901760
    %v179 = vsub.f32 %v177, %v178
    %v180 = vand.u32 %v179, 4294901760
    %181 = vmatmul.mubr.f32.gmra.mrb[0].mxu0 %v180
    %v182 = vpop.f32.mrb[0].mxu0
    %v183 = vadd.f32 %v65, %v182
    %v184 = vpop.f32.mrb[0].mxu0
    %185 = vdwg.mxu0
    %186 = vmatprep.subr.mxu0 0.0
    %v187 = vand.u32 %v38, 4294901760
    %v188 = vsub.f32 %v38, %v187
    %v189 = vand.u32 %v188, 4294901760
    %v190 = vsub.f32 %v188, %v189
    %v191 = vand.u32 %v190, 4294901760
    %192 = vmatpush1.msra.mxu0 %v191
    %193 = vmatprep.subr.mxu0 0.0
    %194 = vmatpush1.msra.mxu0 0.0
    %195 = vmatprep.subr.mxu0 0.0
    %196 = vmatpush1.msra.mxu0 0.0
    %197 = vmatprep.subr.mxu0 0.0
    %198 = vmatpush1.msra.mxu0 0.0
    %199 = vmatprep.subr.mxu0 0.0
    %200 = vmatpush1.msra.mxu0 0.0
    %201 = vmatprep.subr.mxu0 0.0
    %202 = vmatpush1.msra.mxu0 0.0
    %203 = vmatprep.subr.mxu0 0.0
    %204 = vmatpush1.msra.mxu0 0.0
    %205 = vmatprep.subr.mxu0 0.0
    %206 = vmatpush1.msra.mxu0 0.0
    %207 = vmatprep.subr.mxu0 0.0
    %208 = vmatpush1.msra.mxu0 0.0
    %209 = vmatprep.subr.mxu0 0.0
    %210 = vmatpush1.msra.mxu0 0.0
    %211 = vmatprep.subr.mxu0 0.0
    %212 = vmatpush1.msra.mxu0 0.0
    %213 = vmatprep.subr.mxu0 0.0
    %214 = vmatpush1.msra.mxu0 0.0
    %215 = vmatprep.subr.mxu0 0.0
    %216 = vmatpush1.msra.mxu0 0.0
    %217 = vmatprep.subr.mxu0 0.0
    %218 = vmatpush1.msra.mxu0 0.0
    %219 = vmatprep.subr.mxu0 0.0
    %220 = vmatpush1.msra.mxu0 0.0
    %221 = vmatprep.subr.mxu0 0.0
    %222 = vmatpush1.msra.mxu0 0.0
    %223 = vmatprep.subr.mxu0 0.0
    %224 = vmatpush1.msra.mxu0 0.0
    %225 = vmatprep.subr.mxu0 0.0
    %226 = vmatpush1.msra.mxu0 0.0
    %227 = vmatprep.subr.mxu0 0.0
    %228 = vmatpush1.msra.mxu0 0.0
    %229 = vmatprep.subr.mxu0 0.0
    %230 = vmatpush1.msra.mxu0 0.0
    %231 = vmatprep.subr.mxu0 0.0
    %232 = vmatpush1.msra.mxu0 0.0
    %233 = vmatprep.subr.mxu0 0.0
    %234 = vmatpush1.msra.mxu0 0.0
    %235 = vmatprep.subr.mxu0 0.0
    %236 = vmatpush1.msra.mxu0 0.0
    %237 = vmatprep.subr.mxu0 0.0
    %238 = vmatpush1.msra.mxu0 0.0
    %239 = vmatprep.subr.mxu0 0.0
    %240 = vmatpush1.msra.mxu0 0.0
    %241 = vmatprep.subr.mxu0 0.0
    %242 = vmatpush1.msra.mxu0 0.0
    %243 = vmatprep.subr.mxu0 0.0
    %244 = vmatpush1.msra.mxu0 0.0
    %245 = vmatprep.subr.mxu0 0.0
    %246 = vmatpush1.msra.mxu0 0.0
    %247 = vmatprep.subr.mxu0 0.0
    %248 = vmatpush1.msra.mxu0 0.0
    %249 = vmatprep.subr.mxu0 0.0
    %250 = vmatpush1.msra.mxu0 0.0
    %251 = vmatprep.subr.mxu0 0.0
    %252 = vmatpush1.msra.mxu0 0.0
    %253 = vmatprep.subr.mxu0 0.0
    %254 = vmatpush1.msra.mxu0 0.0
    %255 = vmatprep.mubr.f32.mxu0 0.0
    %v256 = vand.u32 %v69, 4294901760
    %257 = vmatmul.mubr.f32.gmra.mrb[0].mxu0 %v256
    %v258 = vpop.f32.mrb[0].mxu0
    %v259 = vadd.f32 %v153, %v258
    %v260 = vpop.f32.mrb[0].mxu0
    %261 = vmatprep.mubr.f32.mxu0 0.0
    %v262 = vand.u32 %v72, 4294901760
    %263 = vmatmul.mubr.f32.gmra.mrb[0].mxu0 %v262
    %v264 = vpop.f32.mrb[0].mxu0
    %v265 = vadd.f32 %v163, %v264
    %v266 = vpop.f32.mrb[0].mxu0
    %267 = vmatprep.mubr.f32.mxu0 0.0
    %v268 = vand.u32 %v75, 4294901760
    %269 = vmatmul.mubr.f32.gmra.mrb[0].mxu0 %v268
    %v270 = vpop.f32.mrb[0].mxu0
    %v271 = vadd.f32 %v173, %v270
    %v272 = vpop.f32.mrb[0].mxu0
    %273 = vmatprep.mubr.f32.mxu0 0.0
    %v274 = vand.u32 %v78, 4294901760
    %275 = vmatmul.mubr.f32.gmra.mrb[0].mxu0 %v274
    %v276 = vpop.f32.mrb[0].mxu0
    %v277 = vadd.f32 %v183, %v276
    %v278 = vpop.f32.mrb[0].mxu0
    %279 = vdwg.mxu0
    %280 = vmatprep.subr.mxu0 0.0
    %v281 = vand.u32 %v38, 4294901760
    %v282 = vsub.f32 %v38, %v281
    %283 = vmatpush1.msra.mxu0 %v282
    %284 = vmatprep.subr.mxu0 0.0
    %285 = vmatpush1.msra.mxu0 0.0
    %286 = vmatprep.subr.mxu0 0.0
    %287 = vmatpush1.msra.mxu0 0.0
    %288 = vmatprep.subr.mxu0 0.0
    %289 = vmatpush1.msra.mxu0 0.0
    %290 = vmatprep.subr.mxu0 0.0
    %291 = vmatpush1.msra.mxu0 0.0
    %292 = vmatprep.subr.mxu0 0.0
    %293 = vmatpush1.msra.mxu0 0.0
    %294 = vmatprep.subr.mxu0 0.0
    %295 = vmatpush1.msra.mxu0 0.0
    %296 = vmatprep.subr.mxu0 0.0
    %297 = vmatpush1.msra.mxu0 0.0
    %298 = vmatprep.subr.mxu0 0.0
    %299 = vmatpush1.msra.mxu0 0.0
    %300 = vmatprep.subr.mxu0 0.0
    %301 = vmatpush1.msra.mxu0 0.0
    %302 = vmatprep.subr.mxu0 0.0
    %303 = vmatpush1.msra.mxu0 0.0
    %304 = vmatprep.subr.mxu0 0.0
    %305 = vmatpush1.msra.mxu0 0.0
    %306 = vmatprep.subr.mxu0 0.0
    %307 = vmatpush1.msra.mxu0 0.0
    %308 = vmatprep.subr.mxu0 0.0
    %309 = vmatpush1.msra.mxu0 0.0
    %310 = vmatprep.subr.mxu0 0.0
    %311 = vmatpush1.msra.mxu0 0.0
    %312 = vmatprep.subr.mxu0 0.0
    %313 = vmatpush1.msra.mxu0 0.0
    %314 = vmatprep.subr.mxu0 0.0
    %315 = vmatpush1.msra.mxu0 0.0
    %316 = vmatprep.subr.mxu0 0.0
    %317 = vmatpush1.msra.mxu0 0.0
    %318 = vmatprep.subr.mxu0 0.0
    %319 = vmatpush1.msra.mxu0 0.0
    %320 = vmatprep.subr.mxu0 0.0
    %321 = vmatpush1.msra.mxu0 0.0
    %322 = vmatprep.subr.mxu0 0.0
    %323 = vmatpush1.msra.mxu0 0.0
    %324 = vmatprep.subr.mxu0 0.0
    %325 = vmatpush1.msra.mxu0 0.0
    %326 = vmatprep.subr.mxu0 0.0
    %327 = vmatpush1.msra.mxu0 0.0
    %328 = vmatprep.subr.mxu0 0.0
    %329 = vmatpush1.msra.mxu0 0.0
    %330 = vmatprep.subr.mxu0 0.0
    %331 = vmatpush1.msra.mxu0 0.0
    %332 = vmatprep.subr.mxu0 0.0
    %333 = vmatpush1.msra.mxu0 0.0
    %334 = vmatprep.subr.mxu0 0.0
    %335 = vmatpush1.msra.mxu0 0.0
    %336 = vmatprep.subr.mxu0 0.0
    %337 = vmatpush1.msra.mxu0 0.0
    %338 = vmatprep.subr.mxu0 0.0
    %339 = vmatpush1.msra.mxu0 0.0
    %340 = vmatprep.subr.mxu0 0.0
    %341 = vmatpush1.msra.mxu0 0.0
    %342 = vmatprep.subr.mxu0 0.0
    %343 = vmatpush1.msra.mxu0 0.0
    %344 = vmatprep.subr.mxu0 0.0
    %345 = vmatpush1.msra.mxu0 0.0
    %346 = vmatprep.mubr.f32.mxu0 0.0
    %v347 = vand.u32 %v69, 4294901760
    %v348 = vsub.f32 %v69, %v347
    %349 = vmatmul.mubr.f32.gmra.mrb[0].mxu0 %v348
    %v350 = vpop.f32.mrb[0].mxu0
    %v351 = vadd.f32 %v259, %v350
    %v352 = vpop.f32.mrb[0].mxu0
    %353 = vmatprep.mubr.f32.mxu0 0.0
    %v354 = vand.u32 %v72, 4294901760
    %v355 = vsub.f32 %v72, %v354
    %356 = vmatmul.mubr.f32.gmra.mrb[0].mxu0 %v355
    %v357 = vpop.f32.mrb[0].mxu0
    %v358 = vadd.f32 %v265, %v357
    %v359 = vpop.f32.mrb[0].mxu0
    %360 = vmatprep.mubr.f32.mxu0 0.0
    %v361 = vand.u32 %v75, 4294901760
    %v362 = vsub.f32 %v75, %v361
    %363 = vmatmul.mubr.f32.gmra.mrb[0].mxu0 %v362
    %v364 = vpop.f32.mrb[0].mxu0
    %v365 = vadd.f32 %v271, %v364
    %v366 = vpop.f32.mrb[0].mxu0
    %367 = vmatprep.mubr.f32.mxu0 0.0
    %v368 = vand.u32 %v78, 4294901760
    %v369 = vsub.f32 %v78, %v368
    %370 = vmatmul.mubr.f32.gmra.mrb[0].mxu0 %v369
    %v371 = vpop.f32.mrb[0].mxu0
    %v372 = vadd.f32 %v277, %v371
    %v373 = vpop.f32.mrb[0].mxu0
    %374 = vdwg.mxu0
    %375 = vmatprep.subr.mxu0 0.0
    %v376 = vand.u32 %v38, 4294901760
    %377 = vmatpush1.msra.mxu0 %v376
    %378 = vmatprep.subr.mxu0 0.0
    %379 = vmatpush1.msra.mxu0 0.0
    %380 = vmatprep.subr.mxu0 0.0
    %381 = vmatpush1.msra.mxu0 0.0
    %382 = vmatprep.subr.mxu0 0.0
    %383 = vmatpush1.msra.mxu0 0.0
    %384 = vmatprep.subr.mxu0 0.0
    %385 = vmatpush1.msra.mxu0 0.0
    %386 = vmatprep.subr.mxu0 0.0
    %387 = vmatpush1.msra.mxu0 0.0
    %388 = vmatprep.subr.mxu0 0.0
    %389 = vmatpush1.msra.mxu0 0.0
    %390 = vmatprep.subr.mxu0 0.0
    %391 = vmatpush1.msra.mxu0 0.0
    %392 = vmatprep.subr.mxu0 0.0
    %393 = vmatpush1.msra.mxu0 0.0
    %394 = vmatprep.subr.mxu0 0.0
    %395 = vmatpush1.msra.mxu0 0.0
    %396 = vmatprep.subr.mxu0 0.0
    %397 = vmatpush1.msra.mxu0 0.0
    %398 = vmatprep.subr.mxu0 0.0
    %399 = vmatpush1.msra.mxu0 0.0
    %400 = vmatprep.subr.mxu0 0.0
    %401 = vmatpush1.msra.mxu0 0.0
    %402 = vmatprep.subr.mxu0 0.0
    %403 = vmatpush1.msra.mxu0 0.0
    %404 = vmatprep.subr.mxu0 0.0
    %405 = vmatpush1.msra.mxu0 0.0
    %406 = vmatprep.subr.mxu0 0.0
    %407 = vmatpush1.msra.mxu0 0.0
    %408 = vmatprep.subr.mxu0 0.0
    %409 = vmatpush1.msra.mxu0 0.0
    %410 = vmatprep.subr.mxu0 0.0
    %411 = vmatpush1.msra.mxu0 0.0
    %412 = vmatprep.subr.mxu0 0.0
    %413 = vmatpush1.msra.mxu0 0.0
    %414 = vmatprep.subr.mxu0 0.0
    %415 = vmatpush1.msra.mxu0 0.0
    %416 = vmatprep.subr.mxu0 0.0
    %417 = vmatpush1.msra.mxu0 0.0
    %418 = vmatprep.subr.mxu0 0.0
    %419 = vmatpush1.msra.mxu0 0.0
    %420 = vmatprep.subr.mxu0 0.0
    %421 = vmatpush1.msra.mxu0 0.0
    %422 = vmatprep.subr.mxu0 0.0
    %423 = vmatpush1.msra.mxu0 0.0
    %424 = vmatprep.subr.mxu0 0.0
    %425 = vmatpush1.msra.mxu0 0.0
    %426 = vmatprep.subr.mxu0 0.0
    %427 = vmatpush1.msra.mxu0 0.0
    %428 = vmatprep.subr.mxu0 0.0
    %429 = vmatpush1.msra.mxu0 0.0
    %430 = vmatprep.subr.mxu0 0.0
    %431 = vmatpush1.msra.mxu0 0.0
    %432 = vmatprep.subr.mxu0 0.0
    %433 = vmatpush1.msra.mxu0 0.0
    %434 = vmatprep.subr.mxu0 0.0
    %435 = vmatpush1.msra.mxu0 0.0
    %436 = vmatprep.subr.mxu0 0.0
    %437 = vmatpush1.msra.mxu0 0.0
    %438 = vmatprep.subr.mxu0 0.0
    %439 = vmatpush1.msra.mxu0 0.0
    %440 = vmatprep.mubr.f32.mxu0 0.0
    %v441 = vand.u32 %v69, 4294901760
    %v442 = vsub.f32 %v69, %v441
    %v443 = vand.u32 %v442, 4294901760
    %444 = vmatmul.mubr.f32.gmra.mrb[0].mxu0 %v443
    %v445 = vpop.f32.mrb[0].mxu0
    %v446 = vadd.f32 %v351, %v445
    %v447 = vpop.f32.mrb[0].mxu0
    %448 = vmatprep.mubr.f32.mxu0 0.0
    %v449 = vand.u32 %v72, 4294901760
    %v450 = vsub.f32 %v72, %v449
    %v451 = vand.u32 %v450, 4294901760
    %452 = vmatmul.mubr.f32.gmra.mrb[0].mxu0 %v451
    %v453 = vpop.f32.mrb[0].mxu0
    %v454 = vadd.f32 %v358, %v453
    %v455 = vpop.f32.mrb[0].mxu0
    %456 = vmatprep.mubr.f32.mxu0 0.0
    %v457 = vand.u32 %v75, 4294901760
    %v458 = vsub.f32 %v75, %v457
    %v459 = vand.u32 %v458, 4294901760
    %460 = vmatmul.mubr.f32.gmra.mrb[0].mxu0 %v459
    %v461 = vpop.f32.mrb[0].mxu0
    %v462 = vadd.f32 %v365, %v461
    %v463 = vpop.f32.mrb[0].mxu0
    %464 = vmatprep.mubr.f32.mxu0 0.0
    %v465 = vand.u32 %v78, 4294901760
    %v466 = vsub.f32 %v78, %v465
    %v467 = vand.u32 %v466, 4294901760
    %468 = vmatmul.mubr.f32.gmra.mrb[0].mxu0 %v467
    %v469 = vpop.f32.mrb[0].mxu0
    %v470 = vadd.f32 %v372, %v469
    %v471 = vpop.f32.mrb[0].mxu0
    %472 = vdwg.mxu0
    %473 = vmatprep.subr.mxu0 0.0
    %v474 = vand.u32 %v38, 4294901760
    %v475 = vsub.f32 %v38, %v474
    %v476 = vand.u32 %v475, 4294901760
    %477 = vmatpush1.msra.mxu0 %v476
    %478 = vmatprep.subr.mxu0 0.0
    %479 = vmatpush1.msra.mxu0 0.0
    %480 = vmatprep.subr.mxu0 0.0
    %481 = vmatpush1.msra.mxu0 0.0
    %482 = vmatprep.subr.mxu0 0.0
    %483 = vmatpush1.msra.mxu0 0.0
    %484 = vmatprep.subr.mxu0 0.0
    %485 = vmatpush1.msra.mxu0 0.0
    %486 = vmatprep.subr.mxu0 0.0
    %487 = vmatpush1.msra.mxu0 0.0
    %488 = vmatprep.subr.mxu0 0.0
    %489 = vmatpush1.msra.mxu0 0.0
    %490 = vmatprep.subr.mxu0 0.0
    %491 = vmatpush1.msra.mxu0 0.0
    %492 = vmatprep.subr.mxu0 0.0
    %493 = vmatpush1.msra.mxu0 0.0
    %494 = vmatprep.subr.mxu0 0.0
    %495 = vmatpush1.msra.mxu0 0.0
    %496 = vmatprep.subr.mxu0 0.0
    %497 = vmatpush1.msra.mxu0 0.0
    %498 = vmatprep.subr.mxu0 0.0
    %499 = vmatpush1.msra.mxu0 0.0
    %500 = vmatprep.subr.mxu0 0.0
    %501 = vmatpush1.msra.mxu0 0.0
    %502 = vmatprep.subr.mxu0 0.0
    %503 = vmatpush1.msra.mxu0 0.0
    %504 = vmatprep.subr.mxu0 0.0
    %505 = vmatpush1.msra.mxu0 0.0
    %506 = vmatprep.subr.mxu0 0.0
    %507 = vmatpush1.msra.mxu0 0.0
    %508 = vmatprep.subr.mxu0 0.0
    %509 = vmatpush1.msra.mxu0 0.0
    %510 = vmatprep.subr.mxu0 0.0
    %511 = vmatpush1.msra.mxu0 0.0
    %512 = vmatprep.subr.mxu0 0.0
    %513 = vmatpush1.msra.mxu0 0.0
    %514 = vmatprep.subr.mxu0 0.0
    %515 = vmatpush1.msra.mxu0 0.0
    %516 = vmatprep.subr.mxu0 0.0
    %517 = vmatpush1.msra.mxu0 0.0
    %518 = vmatprep.subr.mxu0 0.0
    %519 = vmatpush1.msra.mxu0 0.0
    %520 = vmatprep.subr.mxu0 0.0
    %521 = vmatpush1.msra.mxu0 0.0
    %522 = vmatprep.subr.mxu0 0.0
    %523 = vmatpush1.msra.mxu0 0.0
    %524 = vmatprep.subr.mxu0 0.0
    %525 = vmatpush1.msra.mxu0 0.0
    %526 = vmatprep.subr.mxu0 0.0
    %527 = vmatpush1.msra.mxu0 0.0
    %528 = vmatprep.subr.mxu0 0.0
    %529 = vmatpush1.msra.mxu0 0.0
    %530 = vmatprep.subr.mxu0 0.0
    %531 = vmatpush1.msra.mxu0 0.0
    %532 = vmatprep.subr.mxu0 0.0
    %533 = vmatpush1.msra.mxu0 0.0
    %534 = vmatprep.subr.mxu0 0.0
    %535 = vmatpush1.msra.mxu0 0.0
    %536 = vmatprep.subr.mxu0 0.0
    %537 = vmatpush1.msra.mxu0 0.0
    %538 = vmatprep.subr.mxu0 0.0
    %539 = vmatpush1.msra.mxu0 0.0
    %540 = vmatprep.mubr.f32.mxu0 0.0
    %v541 = vand.u32 %v69, 4294901760
    %542 = vmatmul.mubr.f32.gmra.mrb[0].mxu0 %v541
    %v543 = vpop.f32.mrb[0].mxu0
    %v544 = vadd.f32 %v446, %v543
    %v545 = vpop.f32.mrb[0].mxu0
    %546 = vmatprep.mubr.f32.mxu0 0.0
    %v547 = vand.u32 %v72, 4294901760
    %548 = vmatmul.mubr.f32.gmra.mrb[0].mxu0 %v547
    %v549 = vpop.f32.mrb[0].mxu0
    %v550 = vadd.f32 %v454, %v549
    %v551 = vpop.f32.mrb[0].mxu0
    %552 = vmatprep.mubr.f32.mxu0 0.0
    %v553 = vand.u32 %v75, 4294901760
    %554 = vmatmul.mubr.f32.gmra.mrb[0].mxu0 %v553
    %v555 = vpop.f32.mrb[0].mxu0
    %v556 = vadd.f32 %v462, %v555
    %v557 = vpop.f32.mrb[0].mxu0
    %558 = vmatprep.mubr.f32.mxu0 0.0
    %v559 = vand.u32 %v78, 4294901760
    %560 = vmatmul.mubr.f32.gmra.mrb[0].mxu0 %v559
    %v561 = vpop.f32.mrb[0].mxu0
    %v562 = vadd.f32 %v470, %v561
    %v563 = vpop.f32.mrb[0].mxu0
    %564 = vdwg.mxu0
    %565 = vmatprep.subr.mxu0 0.0
    %v566 = vand.u32 %v38, 4294901760
    %567 = vmatpush1.msra.mxu0 %v566
    %568 = vmatprep.subr.mxu0 0.0
    %569 = vmatpush1.msra.mxu0 0.0
    %570 = vmatprep.subr.mxu0 0.0
    %571 = vmatpush1.msra.mxu0 0.0
    %572 = vmatprep.subr.mxu0 0.0
    %573 = vmatpush1.msra.mxu0 0.0
    %574 = vmatprep.subr.mxu0 0.0
    %575 = vmatpush1.msra.mxu0 0.0
    %576 = vmatprep.subr.mxu0 0.0
    %577 = vmatpush1.msra.mxu0 0.0
    %578 = vmatprep.subr.mxu0 0.0
    %579 = vmatpush1.msra.mxu0 0.0
    %580 = vmatprep.subr.mxu0 0.0
    %581 = vmatpush1.msra.mxu0 0.0
    %582 = vmatprep.subr.mxu0 0.0
    %583 = vmatpush1.msra.mxu0 0.0
    %584 = vmatprep.subr.mxu0 0.0
    %585 = vmatpush1.msra.mxu0 0.0
    %586 = vmatprep.subr.mxu0 0.0
    %587 = vmatpush1.msra.mxu0 0.0
    %588 = vmatprep.subr.mxu0 0.0
    %589 = vmatpush1.msra.mxu0 0.0
    %590 = vmatprep.subr.mxu0 0.0
    %591 = vmatpush1.msra.mxu0 0.0
    %592 = vmatprep.subr.mxu0 0.0
    %593 = vmatpush1.msra.mxu0 0.0
    %594 = vmatprep.subr.mxu0 0.0
    %595 = vmatpush1.msra.mxu0 0.0
    %596 = vmatprep.subr.mxu0 0.0
    %597 = vmatpush1.msra.mxu0 0.0
    %598 = vmatprep.subr.mxu0 0.0
    %599 = vmatpush1.msra.mxu0 0.0
    %600 = vmatprep.subr.mxu0 0.0
    %601 = vmatpush1.msra.mxu0 0.0
    %602 = vmatprep.subr.mxu0 0.0
    %603 = vmatpush1.msra.mxu0 0.0
    %604 = vmatprep.subr.mxu0 0.0
    %605 = vmatpush1.msra.mxu0 0.0
    %606 = vmatprep.subr.mxu0 0.0
    %607 = vmatpush1.msra.mxu0 0.0
    %608 = vmatprep.subr.mxu0 0.0
    %609 = vmatpush1.msra.mxu0 0.0
    %610 = vmatprep.subr.mxu0 0.0
    %611 = vmatpush1.msra.mxu0 0.0
    %612 = vmatprep.subr.mxu0 0.0
    %613 = vmatpush1.msra.mxu0 0.0
    %614 = vmatprep.subr.mxu0 0.0
    %615 = vmatpush1.msra.mxu0 0.0
    %616 = vmatprep.subr.mxu0 0.0
    %617 = vmatpush1.msra.mxu0 0.0
    %618 = vmatprep.subr.mxu0 0.0
    %619 = vmatpush1.msra.mxu0 0.0
    %620 = vmatprep.subr.mxu0 0.0
    %621 = vmatpush1.msra.mxu0 0.0
    %622 = vmatprep.subr.mxu0 0.0
    %623 = vmatpush1.msra.mxu0 0.0
    %624 = vmatprep.subr.mxu0 0.0
    %625 = vmatpush1.msra.mxu0 0.0
    %626 = vmatprep.subr.mxu0 0.0
    %627 = vmatpush1.msra.mxu0 0.0
    %628 = vmatprep.subr.mxu0 0.0
    %629 = vmatpush1.msra.mxu0 0.0
    %630 = vmatprep.mubr.f32.mxu0 0.0
    %v631 = vand.u32 %v69, 4294901760
    %632 = vmatmul.mubr.f32.gmra.mrb[0].mxu0 %v631
    %v633 = vpop.f32.mrb[0].mxu0
    %v634 = vadd.f32 %v544, %v633
    %v635 = vpop.f32.mrb[0].mxu0
    %636 = vmatprep.mubr.f32.mxu0 0.0
    %v637 = vand.u32 %v72, 4294901760
    %638 = vmatmul.mubr.f32.gmra.mrb[0].mxu0 %v637
    %v639 = vpop.f32.mrb[0].mxu0
    %v640 = vadd.f32 %v550, %v639
    %v641 = vpop.f32.mrb[0].mxu0
    %642 = vmatprep.mubr.f32.mxu0 0.0
    %v643 = vand.u32 %v75, 4294901760
    %644 = vmatmul.mubr.f32.gmra.mrb[0].mxu0 %v643
    %v645 = vpop.f32.mrb[0].mxu0
    %v646 = vadd.f32 %v556, %v645
    %v647 = vpop.f32.mrb[0].mxu0
    %648 = vmatprep.mubr.f32.mxu0 0.0
    %v649 = vand.u32 %v78, 4294901760
    %650 = vmatmul.mubr.f32.gmra.mrb[0].mxu0 %v649
    %v651 = vpop.f32.mrb[0].mxu0
    %v652 = vadd.f32 %v562, %v651
    %v653 = vpop.f32.mrb[0].mxu0
    %654 = vdwg.mxu0
    %v655 = vmax.f32 %v634, 0.0
    %v656 = vmax.f32 %v640, 0.0
    %v657 = vmax.f32 %v646, 0.0
    %v658 = vmax.f32 %v652, 0.0
    %v659 = vld [vmem:[%s5] sm:$0x1]
    %s660 = sld [smem:[#allocation2]]
    %v661 = vstv %s660
    %vm662 = vcmask 261120
    %v664 = vsel %vm662, %v659, 0
    %666 = vmatprep.subr.mxu0 0.0
    %v667 = vand.u32 %v655, 4294901760
    %668 = vmatpush1.msra.mxu0 %v667
    %669 = vmatprep.subr.mxu0 0.0
    %v670 = vand.u32 %v656, 4294901760
    %671 = vmatpush1.msra.mxu0 %v670
    %672 = vmatprep.subr.mxu0 0.0
    %v673 = vand.u32 %v657, 4294901760
    %674 = vmatpush1.msra.mxu0 %v673
    %675 = vmatprep.subr.mxu0 0.0
    %v676 = vand.u32 %v658, 4294901760
    %677 = vmatpush1.msra.mxu0 %v676
    %678 = vmatprep.subr.mxu0 0.0
    %679 = vmatpush1.msra.mxu0 0.0
    %680 = vmatprep.subr.mxu0 0.0
    %681 = vmatpush1.msra.mxu0 0.0
    %682 = vmatprep.subr.mxu0 0.0
    %683 = vmatpush1.msra.mxu0 0.0
    %684 = vmatprep.subr.mxu0 0.0
    %685 = vmatpush1.msra.mxu0 0.0
    %686 = vmatprep.subr.mxu0 0.0
    %687 = vmatpush1.msra.mxu0 0.0
    %688 = vmatprep.subr.mxu0 0.0
    %689 = vmatpush1.msra.mxu0 0.0
    %690 = vmatprep.subr.mxu0 0.0
    %691 = vmatpush1.msra.mxu0 0.0
    %692 = vmatprep.subr.mxu0 0.0
    %693 = vmatpush1.msra.mxu0 0.0
    %694 = vmatprep.subr.mxu0 0.0
    %695 = vmatpush1.msra.mxu0 0.0
    %696 = vmatprep.subr.mxu0 0.0
    %697 = vmatpush1.msra.mxu0 0.0
    %698 = vmatprep.subr.mxu0 0.0
    %699 = vmatpush1.msra.mxu0 0.0
    %700 = vmatprep.subr.mxu0 0.0
    %701 = vmatpush1.msra.mxu0 0.0
    %702 = vmatprep.subr.mxu0 0.0
    %703 = vmatpush1.msra.mxu0 0.0
    %704 = vmatprep.subr.mxu0 0.0
    %705 = vmatpush1.msra.mxu0 0.0
    %706 = vmatprep.subr.mxu0 0.0
    %707 = vmatpush1.msra.mxu0 0.0
    %708 = vmatprep.subr.mxu0 0.0
    %709 = vmatpush1.msra.mxu0 0.0
    %710 = vmatprep.subr.mxu0 0.0
    %711 = vmatpush1.msra.mxu0 0.0
    %712 = vmatprep.subr.mxu0 0.0
    %713 = vmatpush1.msra.mxu0 0.0
    %714 = vmatprep.subr.mxu0 0.0
    %715 = vmatpush1.msra.mxu0 0.0
    %716 = vmatprep.subr.mxu0 0.0
    %717 = vmatpush1.msra.mxu0 0.0
    %718 = vmatprep.subr.mxu0 0.0
    %719 = vmatpush1.msra.mxu0 0.0
    %720 = vmatprep.subr.mxu0 0.0
    %721 = vmatpush1.msra.mxu0 0.0
    %722 = vmatprep.subr.mxu0 0.0
    %723 = vmatpush1.msra.mxu0 0.0
    %724 = vmatprep.subr.mxu0 0.0
    %725 = vmatpush1.msra.mxu0 0.0
    %726 = vmatprep.subr.mxu0 0.0
    %727 = vmatpush1.msra.mxu0 0.0
    %728 = vmatprep.subr.mxu0 0.0
    %729 = vmatpush1.msra.mxu0 0.0
    %730 = vmatprep.subr.mxu0 0.0
    %731 = vmatpush1.msra.mxu0 0.0
    %732 = vmatprep.subr.mxu0 0.0
    %733 = vmatpush1.msra.mxu0 0.0
    %734 = vmatprep.mubr.f32.mxu0 0.0
    %v735 = vand.u32 %v664, 4294901760
    %v736 = vsub.f32 %v664, %v735
    %v737 = vand.u32 %v736, 4294901760
    %v738 = vsub.f32 %v736, %v737
    %v739 = vand.u32 %v738, 4294901760
    %740 = vmatmul.mubr.f32.gmra.mrb[0].mxu0 %v739
    %v741 = vpop.f32.mrb[0].mxu0
    %v742 = vadd.f32 %v661, %v741
    %v743 = vpop.f32.mrb[0].mxu0
    %744 = vdwg.mxu0
    %745 = vmatprep.subr.mxu0 0.0
    %v746 = vand.u32 %v655, 4294901760
    %v747 = vsub.f32 %v655, %v746
    %v748 = vand.u32 %v747, 4294901760
    %v749 = vsub.f32 %v747, %v748
    %v750 = vand.u32 %v749, 4294901760
    %751 = vmatpush1.msra.mxu0 %v750
    %752 = vmatprep.subr.mxu0 0.0
    %v753 = vand.u32 %v656, 4294901760
    %v754 = vsub.f32 %v656, %v753
    %v755 = vand.u32 %v754, 4294901760
    %v756 = vsub.f32 %v754, %v755
    %v757 = vand.u32 %v756, 4294901760
    %758 = vmatpush1.msra.mxu0 %v757
    %759 = vmatprep.subr.mxu0 0.0
    %v760 = vand.u32 %v657, 4294901760
    %v761 = vsub.f32 %v657, %v760
    %v762 = vand.u32 %v761, 4294901760
    %v763 = vsub.f32 %v761, %v762
    %v764 = vand.u32 %v763, 4294901760
    %765 = vmatpush1.msra.mxu0 %v764
    %766 = vmatprep.subr.mxu0 0.0
    %v767 = vand.u32 %v658, 4294901760
    %v768 = vsub.f32 %v658, %v767
    %v769 = vand.u32 %v768, 4294901760
    %v770 = vsub.f32 %v768, %v769
    %v771 = vand.u32 %v770, 4294901760
    %772 = vmatpush1.msra.mxu0 %v771
    %773 = vmatprep.subr.mxu0 0.0
    %774 = vmatpush1.msra.mxu0 0.0
    %775 = vmatprep.subr.mxu0 0.0
    %776 = vmatpush1.msra.mxu0 0.0
    %777 = vmatprep.subr.mxu0 0.0
    %778 = vmatpush1.msra.mxu0 0.0
    %779 = vmatprep.subr.mxu0 0.0
    %780 = vmatpush1.msra.mxu0 0.0
    %781 = vmatprep.subr.mxu0 0.0
    %782 = vmatpush1.msra.mxu0 0.0
    %783 = vmatprep.subr.mxu0 0.0
    %784 = vmatpush1.msra.mxu0 0.0
    %785 = vmatprep.subr.mxu0 0.0
    %786 = vmatpush1.msra.mxu0 0.0
    %787 = vmatprep.subr.mxu0 0.0
    %788 = vmatpush1.msra.mxu0 0.0
    %789 = vmatprep.subr.mxu0 0.0
    %790 = vmatpush1.msra.mxu0 0.0
    %791 = vmatprep.subr.mxu0 0.0
    %792 = vmatpush1.msra.mxu0 0.0
    %793 = vmatprep.subr.mxu0 0.0
    %794 = vmatpush1.msra.mxu0 0.0
    %795 = vmatprep.subr.mxu0 0.0
    %796 = vmatpush1.msra.mxu0 0.0
    %797 = vmatprep.subr.mxu0 0.0
    %798 = vmatpush1.msra.mxu0 0.0
    %799 = vmatprep.subr.mxu0 0.0
    %800 = vmatpush1.msra.mxu0 0.0
    %801 = vmatprep.subr.mxu0 0.0
    %802 = vmatpush1.msra.mxu0 0.0
    %803 = vmatprep.subr.mxu0 0.0
    %804 = vmatpush1.msra.mxu0 0.0
    %805 = vmatprep.subr.mxu0 0.0
    %806 = vmatpush1.msra.mxu0 0.0
    %807 = vmatprep.subr.mxu0 0.0
    %808 = vmatpush1.msra.mxu0 0.0
    %809 = vmatprep.subr.mxu0 0.0
    %810 = vmatpush1.msra.mxu0 0.0
    %811 = vmatprep.subr.mxu0 0.0
    %812 = vmatpush1.msra.mxu0 0.0
    %813 = vmatprep.subr.mxu0 0.0
    %814 = vmatpush1.msra.mxu0 0.0
    %815 = vmatprep.subr.mxu0 0.0
    %816 = vmatpush1.msra.mxu0 0.0
    %817 = vmatprep.subr.mxu0 0.0
    %818 = vmatpush1.msra.mxu0 0.0
    %819 = vmatprep.subr.mxu0 0.0
    %820 = vmatpush1.msra.mxu0 0.0
    %821 = vmatprep.subr.mxu0 0.0
    %822 = vmatpush1.msra.mxu0 0.0
    %823 = vmatprep.subr.mxu0 0.0
    %824 = vmatpush1.msra.mxu0 0.0
    %825 = vmatprep.subr.mxu0 0.0
    %826 = vmatpush1.msra.mxu0 0.0
    %827 = vmatprep.subr.mxu0 0.0
    %828 = vmatpush1.msra.mxu0 0.0
    %829 = vmatprep.mubr.f32.mxu0 0.0
    %v830 = vand.u32 %v664, 4294901760
    %831 = vmatmul.mubr.f32.gmra.mrb[0].mxu0 %v830
    %v832 = vpop.f32.mrb[0].mxu0
    %v833 = vadd.f32 %v742, %v832
    %v834 = vpop.f32.mrb[0].mxu0
    %835 = vdwg.mxu0
    %836 = vmatprep.subr.mxu0 0.0
    %v837 = vand.u32 %v655, 4294901760
    %v838 = vsub.f32 %v655, %v837
    %839 = vmatpush1.msra.mxu0 %v838
    %840 = vmatprep.subr.mxu0 0.0
    %v841 = vand.u32 %v656, 4294901760
    %v842 = vsub.f32 %v656, %v841
    %843 = vmatpush1.msra.mxu0 %v842
    %844 = vmatprep.subr.mxu0 0.0
    %v845 = vand.u32 %v657, 4294901760
    %v846 = vsub.f32 %v657, %v845
    %847 = vmatpush1.msra.mxu0 %v846
    %848 = vmatprep.subr.mxu0 0.0
    %v849 = vand.u32 %v658, 4294901760
    %v850 = vsub.f32 %v658, %v849
    %851 = vmatpush1.msra.mxu0 %v850
    %852 = vmatprep.subr.mxu0 0.0
    %853 = vmatpush1.msra.mxu0 0.0
    %854 = vmatprep.subr.mxu0 0.0
    %855 = vmatpush1.msra.mxu0 0.0
    %856 = vmatprep.subr.mxu0 0.0
    %857 = vmatpush1.msra.mxu0 0.0
    %858 = vmatprep.subr.mxu0 0.0
    %859 = vmatpush1.msra.mxu0 0.0
    %860 = vmatprep.subr.mxu0 0.0
    %861 = vmatpush1.msra.mxu0 0.0
    %862 = vmatprep.subr.mxu0 0.0
    %863 = vmatpush1.msra.mxu0 0.0
    %864 = vmatprep.subr.mxu0 0.0
    %865 = vmatpush1.msra.mxu0 0.0
    %866 = vmatprep.subr.mxu0 0.0
    %867 = vmatpush1.msra.mxu0 0.0
    %868 = vmatprep.subr.mxu0 0.0
    %869 = vmatpush1.msra.mxu0 0.0
    %870 = vmatprep.subr.mxu0 0.0
    %871 = vmatpush1.msra.mxu0 0.0
    %872 = vmatprep.subr.mxu0 0.0
    %873 = vmatpush1.msra.mxu0 0.0
    %874 = vmatprep.subr.mxu0 0.0
    %875 = vmatpush1.msra.mxu0 0.0
    %876 = vmatprep.subr.mxu0 0.0
    %877 = vmatpush1.msra.mxu0 0.0
    %878 = vmatprep.subr.mxu0 0.0
    %879 = vmatpush1.msra.mxu0 0.0
    %880 = vmatprep.subr.mxu0 0.0
    %881 = vmatpush1.msra.mxu0 0.0
    %882 = vmatprep.subr.mxu0 0.0
    %883 = vmatpush1.msra.mxu0 0.0
    %884 = vmatprep.subr.mxu0 0.0
    %885 = vmatpush1.msra.mxu0 0.0
    %886 = vmatprep.subr.mxu0 0.0
    %887 = vmatpush1.msra.mxu0 0.0
    %888 = vmatprep.subr.mxu0 0.0
    %889 = vmatpush1.msra.mxu0 0.0
    %890 = vmatprep.subr.mxu0 0.0
    %891 = vmatpush1.msra.mxu0 0.0
    %892 = vmatprep.subr.mxu0 0.0
    %893 = vmatpush1.msra.mxu0 0.0
    %894 = vmatprep.subr.mxu0 0.0
    %895 = vmatpush1.msra.mxu0 0.0
    %896 = vmatprep.subr.mxu0 0.0
    %897 = vmatpush1.msra.mxu0 0.0
    %898 = vmatprep.subr.mxu0 0.0
    %899 = vmatpush1.msra.mxu0 0.0
    %900 = vmatprep.subr.mxu0 0.0
    %901 = vmatpush1.msra.mxu0 0.0
    %902 = vmatprep.subr.mxu0 0.0
    %903 = vmatpush1.msra.mxu0 0.0
    %904 = vmatprep.subr.mxu0 0.0
    %905 = vmatpush1.msra.mxu0 0.0
    %906 = vmatprep.subr.mxu0 0.0
    %907 = vmatpush1.msra.mxu0 0.0
    %908 = vmatprep.mubr.f32.mxu0 0.0
    %v909 = vand.u32 %v664, 4294901760
    %v910 = vsub.f32 %v664, %v909
    %911 = vmatmul.mubr.f32.gmra.mrb[0].mxu0 %v910
    %v912 = vpop.f32.mrb[0].mxu0
    %v913 = vadd.f32 %v833, %v912
    %v914 = vpop.f32.mrb[0].mxu0
    %915 = vdwg.mxu0
    %916 = vmatprep.subr.mxu0 0.0
    %v917 = vand.u32 %v655, 4294901760
    %918 = vmatpush1.msra.mxu0 %v917
    %919 = vmatprep.subr.mxu0 0.0
    %v920 = vand.u32 %v656, 4294901760
    %921 = vmatpush1.msra.mxu0 %v920
    %922 = vmatprep.subr.mxu0 0.0
    %v923 = vand.u32 %v657, 4294901760
    %924 = vmatpush1.msra.mxu0 %v923
    %925 = vmatprep.subr.mxu0 0.0
    %v926 = vand.u32 %v658, 4294901760
    %927 = vmatpush1.msra.mxu0 %v926
    %928 = vmatprep.subr.mxu0 0.0
    %929 = vmatpush1.msra.mxu0 0.0
    %930 = vmatprep.subr.mxu0 0.0
    %931 = vmatpush1.msra.mxu0 0.0
    %932 = vmatprep.subr.mxu0 0.0
    %933 = vmatpush1.msra.mxu0 0.0
    %934 = vmatprep.subr.mxu0 0.0
    %935 = vmatpush1.msra.mxu0 0.0
    %936 = vmatprep.subr.mxu0 0.0
    %937 = vmatpush1.msra.mxu0 0.0
    %938 = vmatprep.subr.mxu0 0.0
    %939 = vmatpush1.msra.mxu0 0.0
    %940 = vmatprep.subr.mxu0 0.0
    %941 = vmatpush1.msra.mxu0 0.0
    %942 = vmatprep.subr.mxu0 0.0
    %943 = vmatpush1.msra.mxu0 0.0
    %944 = vmatprep.subr.mxu0 0.0
    %945 = vmatpush1.msra.mxu0 0.0
    %946 = vmatprep.subr.mxu0 0.0
    %947 = vmatpush1.msra.mxu0 0.0
    %948 = vmatprep.subr.mxu0 0.0
    %949 = vmatpush1.msra.mxu0 0.0
    %950 = vmatprep.subr.mxu0 0.0
    %951 = vmatpush1.msra.mxu0 0.0
    %952 = vmatprep.subr.mxu0 0.0
    %953 = vmatpush1.msra.mxu0 0.0
    %954 = vmatprep.subr.mxu0 0.0
    %955 = vmatpush1.msra.mxu0 0.0
    %956 = vmatprep.subr.mxu0 0.0
    %957 = vmatpush1.msra.mxu0 0.0
    %958 = vmatprep.subr.mxu0 0.0
    %959 = vmatpush1.msra.mxu0 0.0
    %960 = vmatprep.subr.mxu0 0.0
    %961 = vmatpush1.msra.mxu0 0.0
    %962 = vmatprep.subr.mxu0 0.0
    %963 = vmatpush1.msra.mxu0 0.0
    %964 = vmatprep.subr.mxu0 0.0
    %965 = vmatpush1.msra.mxu0 0.0
    %966 = vmatprep.subr.mxu0 0.0
    %967 = vmatpush1.msra.mxu0 0.0
    %968 = vmatprep.subr.mxu0 0.0
    %969 = vmatpush1.msra.mxu0 0.0
    %970 = vmatprep.subr.mxu0 0.0
    %971 = vmatpush1.msra.mxu0 0.0
    %972 = vmatprep.subr.mxu0 0.0
    %973 = vmatpush1.msra.mxu0 0.0
    %974 = vmatprep.subr.mxu0 0.0
    %975 = vmatpush1.msra.mxu0 0.0
    %976 = vmatprep.subr.mxu0 0.0
    %977 = vmatpush1.msra.mxu0 0.0
    %978 = vmatprep.subr.mxu0 0.0
    %979 = vmatpush1.msra.mxu0 0.0
    %980 = vmatprep.subr.mxu0 0.0
    %981 = vmatpush1.msra.mxu0 0.0
    %982 = vmatprep.subr.mxu0 0.0
    %983 = vmatpush1.msra.mxu0 0.0
    %984 = vmatprep.mubr.f32.mxu0 0.0
    %v985 = vand.u32 %v664, 4294901760
    %v986 = vsub.f32 %v664, %v985
    %v987 = vand.u32 %v986, 4294901760
    %988 = vmatmul.mubr.f32.gmra.mrb[0].mxu0 %v987
    %v989 = vpop.f32.mrb[0].mxu0
    %v990 = vadd.f32 %v913, %v989
    %v991 = vpop.f32.mrb[0].mxu0
    %992 = vdwg.mxu0
    %993 = vmatprep.subr.mxu0 0.0
    %v994 = vand.u32 %v655, 4294901760
    %v995 = vsub.f32 %v655, %v994
    %v996 = vand.u32 %v995, 4294901760
    %997 = vmatpush1.msra.mxu0 %v996
    %998 = vmatprep.subr.mxu0 0.0
    %v999 = vand.u32 %v656, 4294901760
    %v1000 = vsub.f32 %v656, %v999
    %v1001 = vand.u32 %v1000, 4294901760
    %1002 = vmatpush1.msra.mxu0 %v1001
    %1003 = vmatprep.subr.mxu0 0.0
    %v1004 = vand.u32 %v657, 4294901760
    %v1005 = vsub.f32 %v657, %v1004
    %v1006 = vand.u32 %v1005, 4294901760
    %1007 = vmatpush1.msra.mxu0 %v1006
    %1008 = vmatprep.subr.mxu0 0.0
    %v1009 = vand.u32 %v658, 4294901760
    %v1010 = vsub.f32 %v658, %v1009
    %v1011 = vand.u32 %v1010, 4294901760
    %1012 = vmatpush1.msra.mxu0 %v1011
    %1013 = vmatprep.subr.mxu0 0.0
    %1014 = vmatpush1.msra.mxu0 0.0
    %1015 = vmatprep.subr.mxu0 0.0
    %1016 = vmatpush1.msra.mxu0 0.0
    %1017 = vmatprep.subr.mxu0 0.0
    %1018 = vmatpush1.msra.mxu0 0.0
    %1019 = vmatprep.subr.mxu0 0.0
    %1020 = vmatpush1.msra.mxu0 0.0
    %1021 = vmatprep.subr.mxu0 0.0
    %1022 = vmatpush1.msra.mxu0 0.0
    %1023 = vmatprep.subr.mxu0 0.0
    %1024 = vmatpush1.msra.mxu0 0.0
    %1025 = vmatprep.subr.mxu0 0.0
    %1026 = vmatpush1.msra.mxu0 0.0
    %1027 = vmatprep.subr.mxu0 0.0
    %1028 = vmatpush1.msra.mxu0 0.0
    %1029 = vmatprep.subr.mxu0 0.0
    %1030 = vmatpush1.msra.mxu0 0.0
    %1031 = vmatprep.subr.mxu0 0.0
    %1032 = vmatpush1.msra.mxu0 0.0
    %1033 = vmatprep.subr.mxu0 0.0
    %1034 = vmatpush1.msra.mxu0 0.0
    %1035 = vmatprep.subr.mxu0 0.0
    %1036 = vmatpush1.msra.mxu0 0.0
    %1037 = vmatprep.subr.mxu0 0.0
    %1038 = vmatpush1.msra.mxu0 0.0
    %1039 = vmatprep.subr.mxu0 0.0
    %1040 = vmatpush1.msra.mxu0 0.0
    %1041 = vmatprep.subr.mxu0 0.0
    %1042 = vmatpush1.msra.mxu0 0.0
    %1043 = vmatprep.subr.mxu0 0.0
    %1044 = vmatpush1.msra.mxu0 0.0
    %1045 = vmatprep.subr.mxu0 0.0
    %1046 = vmatpush1.msra.mxu0 0.0
    %1047 = vmatprep.subr.mxu0 0.0
    %1048 = vmatpush1.msra.mxu0 0.0
    %1049 = vmatprep.subr.mxu0 0.0
    %1050 = vmatpush1.msra.mxu0 0.0
    %1051 = vmatprep.subr.mxu0 0.0
    %1052 = vmatpush1.msra.mxu0 0.0
    %1053 = vmatprep.subr.mxu0 0.0
    %1054 = vmatpush1.msra.mxu0 0.0
    %1055 = vmatprep.subr.mxu0 0.0
    %1056 = vmatpush1.msra.mxu0 0.0
    %1057 = vmatprep.subr.mxu0 0.0
    %1058 = vmatpush1.msra.mxu0 0.0
    %1059 = vmatprep.subr.mxu0 0.0
    %1060 = vmatpush1.msra.mxu0 0.0
    %1061 = vmatprep.subr.mxu0 0.0
    %1062 = vmatpush1.msra.mxu0 0.0
    %1063 = vmatprep.subr.mxu0 0.0
    %1064 = vmatpush1.msra.mxu0 0.0
    %1065 = vmatprep.subr.mxu0 0.0
    %1066 = vmatpush1.msra.mxu0 0.0
    %1067 = vmatprep.subr.mxu0 0.0
    %1068 = vmatpush1.msra.mxu0 0.0
    %1069 = vmatprep.mubr.f32.mxu0 0.0
    %v1070 = vand.u32 %v664, 4294901760
    %1071 = vmatmul.mubr.f32.gmra.mrb[0].mxu0 %v1070
    %v1072 = vpop.f32.mrb[0].mxu0
    %v1073 = vadd.f32 %v990, %v1072
    %v1074 = vpop.f32.mrb[0].mxu0
    %1075 = vdwg.mxu0
    %1076 = vmatprep.subr.mxu0 0.0
    %v1077 = vand.u32 %v655, 4294901760
    %1078 = vmatpush1.msra.mxu0 %v1077
    %1079 = vmatprep.subr.mxu0 0.0
    %v1080 = vand.u32 %v656, 4294901760
    %1081 = vmatpush1.msra.mxu0 %v1080
    %1082 = vmatprep.subr.mxu0 0.0
    %v1083 = vand.u32 %v657, 4294901760
    %1084 = vmatpush1.msra.mxu0 %v1083
    %1085 = vmatprep.subr.mxu0 0.0
    %v1086 = vand.u32 %v658, 4294901760
    %1087 = vmatpush1.msra.mxu0 %v1086
    %1088 = vmatprep.subr.mxu0 0.0
    %1089 = vmatpush1.msra.mxu0 0.0
    %1090 = vmatprep.subr.mxu0 0.0
    %1091 = vmatpush1.msra.mxu0 0.0
    %1092 = vmatprep.subr.mxu0 0.0
    %1093 = vmatpush1.msra.mxu0 0.0
    %1094 = vmatprep.subr.mxu0 0.0
    %1095 = vmatpush1.msra.mxu0 0.0
    %1096 = vmatprep.subr.mxu0 0.0
    %1097 = vmatpush1.msra.mxu0 0.0
    %1098 = vmatprep.subr.mxu0 0.0
    %1099 = vmatpush1.msra.mxu0 0.0
    %1100 = vmatprep.subr.mxu0 0.0
    %1101 = vmatpush1.msra.mxu0 0.0
    %1102 = vmatprep.subr.mxu0 0.0
    %1103 = vmatpush1.msra.mxu0 0.0
    %1104 = vmatprep.subr.mxu0 0.0
    %1105 = vmatpush1.msra.mxu0 0.0
    %1106 = vmatprep.subr.mxu0 0.0
    %1107 = vmatpush1.msra.mxu0 0.0
    %1108 = vmatprep.subr.mxu0 0.0
    %1109 = vmatpush1.msra.mxu0 0.0
    %1110 = vmatprep.subr.mxu0 0.0
    %1111 = vmatpush1.msra.mxu0 0.0
    %1112 = vmatprep.subr.mxu0 0.0
    %1113 = vmatpush1.msra.mxu0 0.0
    %1114 = vmatprep.subr.mxu0 0.0
    %1115 = vmatpush1.msra.mxu0 0.0
    %1116 = vmatprep.subr.mxu0 0.0
    %1117 = vmatpush1.msra.mxu0 0.0
    %1118 = vmatprep.subr.mxu0 0.0
    %1119 = vmatpush1.msra.mxu0 0.0
    %1120 = vmatprep.subr.mxu0 0.0
    %1121 = vmatpush1.msra.mxu0 0.0
    %1122 = vmatprep.subr.mxu0 0.0
    %1123 = vmatpush1.msra.mxu0 0.0
    %1124 = vmatprep.subr.mxu0 0.0
    %1125 = vmatpush1.msra.mxu0 0.0
    %1126 = vmatprep.subr.mxu0 0.0
    %1127 = vmatpush1.msra.mxu0 0.0
    %1128 = vmatprep.subr.mxu0 0.0
    %1129 = vmatpush1.msra.mxu0 0.0
    %1130 = vmatprep.subr.mxu0 0.0
    %1131 = vmatpush1.msra.mxu0 0.0
    %1132 = vmatprep.subr.mxu0 0.0
    %1133 = vmatpush1.msra.mxu0 0.0
    %1134 = vmatprep.subr.mxu0 0.0
    %1135 = vmatpush1.msra.mxu0 0.0
    %1136 = vmatprep.subr.mxu0 0.0
    %1137 = vmatpush1.msra.mxu0 0.0
    %1138 = vmatprep.subr.mxu0 0.0
    %1139 = vmatpush1.msra.mxu0 0.0
    %1140 = vmatprep.subr.mxu0 0.0
    %1141 = vmatpush1.msra.mxu0 0.0
    %1142 = vmatprep.subr.mxu0 0.0
    %1143 = vmatpush1.msra.mxu0 0.0
    %1144 = vmatprep.mubr.f32.mxu0 0.0
    %v1145 = vand.u32 %v664, 4294901760
    %1146 = vmatmul.mubr.f32.gmra.mrb[0].mxu0 %v1145
    %v1147 = vpop.f32.mrb[0].mxu0
    %v1148 = vadd.f32 %v1073, %v1147
    %v1149 = vpop.f32.mrb[0].mxu0
    %1150 = vdwg.mxu0
    %v1151 = vsub.f32 0.0, %v1148
    %v1152 = vmul.f32 %v1151, 1.442695
    %v1153 = vpow.pop %v1152
    %v1154 = vadd.f32 %v1153, 1.0
    %v1155 = vrcp.pop %v1154
    %1156 = vst [vmem:[#allocation3] sm:$0x1] %v1155
    // Predicated region
    $region30: #{synthetic_reward_predictor_batched.1} parent=1 // pred_check
      _
    $region31: #{synthetic_reward_predictor_batched.1} parent=1 // pred_check_branch
      %1158 = sbr.rel (0) target = $region33
    $region32: #{synthetic_reward_predictor_batched.1} parent=1 // pred_region
      %s1160 = ssub.s32 16, 16
      %1161 = vsyncadd [#allocation4], %s1160
      %s1163 = sshll.u32 [#allocation3], 4
      %s1164 = int_to_ptr.vmem [resolvable:$true] %s1163
      %1166 = dma.vmem_to_hbm [thread:$0]  %s1164, 16, %s7, [#allocation4]
    $region33: #{synthetic_reward_predictor_batched.1} parent=1 // pred_fallthru
      _
    // Predicated region
    $region34: #{synthetic_reward_predictor_batched.1} parent=1 // pred_check
      _
    $region35: #{synthetic_reward_predictor_batched.1} parent=1 // pred_check_branch
      %1168 = sbr.rel (0) target = $region37
    $region36: #{synthetic_reward_predictor_batched.1} parent=1 // pred_region
      %1169 = dma.done [#allocation4], 16
    $region37: #{synthetic_reward_predictor_batched.1} parent=1 // pred_fallthru
      _
    %1170 = vsyncpa [#allocation4], 1

</llo_original>
